<compile_context>
chip_gen: v5e
topology: v5e:2x2
jax: 0.10.0
libtpu: 0.0.40
codegen_flags: <defaults>
</compile_context>

<pallas_src>
import functools
import math

import jax
import jax.numpy as jnp
from jax.experimental import pallas as pl
from jax.experimental.pallas import tpu as pltpu


def _round_up(v, m):
    return ((v + m - 1) // m) * m


def _project_kernel(x_ref, wcat_ref, bias_ref, xw_ref, xr_ref, *, f_out_p):
    """Fused projections: xw = x @ W (bf16), xr = x @ W_root + bias (f32).

    One (tile_m, F_in) @ (F_in, 2*F_out_p) matmul instead of two K=F_in matmuls.
    """
    both = jnp.dot(x_ref[...], wcat_ref[...],
                   preferred_element_type=jnp.float32)   # (tile_m, 2*F_out_p)
    xw_ref[...] = both[:, :f_out_p].astype(xw_ref.dtype)
    xr_ref[...] = both[:, f_out_p:] + bias_ref[...]


def _aggregate_kernel(adj_ref, xw_ref, inv_deg_ref, xr_ref, o_ref, acc_ref):
    """K-tiled mean aggregation: out = (adj @ xw) * inv_deg + xr.

    adj_ref     : (tile_n, tile_k) bf16   adjacency tile (0/1)
    xw_ref      : (tile_k, F_out_p) bf16  pre-projected neighbor features
    inv_deg_ref : (tile_n, 1) f32         1 / max(degree, 1) for these rows
    xr_ref      : (tile_n, F_out_p) f32   x @ root_weight + bias for these rows
    o_ref       : (tile_n, F_out_p)
    acc_ref     : (tile_n, F_out_p) f32   VMEM accumulator
    """
    k = pl.program_id(1)

    @pl.when(k == 0)
    def _():
        acc_ref[...] = jnp.zeros_like(acc_ref)

    acc_ref[...] += jnp.dot(adj_ref[...], xw_ref[...],
                            preferred_element_type=jnp.float32)

    @pl.when(k == pl.num_programs(1) - 1)
    def _():
        o_ref[...] = (acc_ref[...] * inv_deg_ref[...]
                      + xr_ref[...]).astype(o_ref.dtype)


def sage_conv(x, adj, weight, root_weight, bias, *, tile_n=256, tile_k=512):
    """SAGEConv forward: mean-aggregate neighbors, two linear maps, bias add."""
    n, f_in = x.shape
    f_out = weight.shape[1]
    assert adj.shape == (n, n)
    assert tile_n % 8 == 0 and tile_k % 128 == 0

    tile_m = 128                          # row tile for the projection kernel
    f_out_p = _round_up(f_out, 128)       # lane-dense output stores
    n_pad = _round_up(n, math.lcm(tile_n, tile_k, tile_m))

    # ---- wrapper-side prep (degree precompute, padding, narrow dtypes) ----
    deg = jnp.sum(adj.astype(jnp.float32), axis=-1, keepdims=True)        # (n, 1)
    inv_deg = 1.0 / jnp.maximum(deg, 1.0)
    inv_deg_p = jnp.pad(inv_deg, ((0, n_pad - n), (0, 0)))

    adj_p = jnp.pad(adj, ((0, n_pad - n), (0, n_pad - n))).astype(jnp.bfloat16)
    x_p = jnp.pad(x.astype(jnp.float32), ((0, n_pad - n), (0, 0)))

    w_p = jnp.pad(weight, ((0, 0), (0, f_out_p - f_out)))
    wr_p = jnp.pad(root_weight, ((0, 0), (0, f_out_p - f_out)))
    wcat = jnp.concatenate([w_p, wr_p], axis=1)                 # (f_in, 2*f_out_p)
    bias_p = jnp.pad(bias.reshape(1, f_out), ((0, 0), (0, f_out_p - f_out)))

    # ---- kernel 1: one-shot fused projections ----
    xw, xr = pl.pallas_call(
        functools.partial(_project_kernel, f_out_p=f_out_p),
        out_shape=(
            jax.ShapeDtypeStruct((n_pad, f_out_p), jnp.bfloat16),
            jax.ShapeDtypeStruct((n_pad, f_out_p), jnp.float32),
        ),
        grid_spec=pltpu.PrefetchScalarGridSpec(
            num_scalar_prefetch=0,
            grid=(n_pad // tile_m,),
            in_specs=[
                pl.BlockSpec((tile_m, f_in), lambda i: (i, 0)),
                pl.BlockSpec((f_in, 2 * f_out_p), lambda i: (0, 0)),
                pl.BlockSpec((1, f_out_p), lambda i: (0, 0)),
            ],
            out_specs=(
                pl.BlockSpec((tile_m, f_out_p), lambda i: (i, 0)),
                pl.BlockSpec((tile_m, f_out_p), lambda i: (i, 0)),
            ),
        ),
        compiler_params=pltpu.CompilerParams(
            dimension_semantics=("parallel",),
        ),
    )(x_p, wcat, bias_p)

    # ---- kernel 2: K-tiled bf16 aggregation with f32 accumulator ----
    out_p = pl.pallas_call(
        _aggregate_kernel,
        out_shape=jax.ShapeDtypeStruct((n_pad, f_out_p), x.dtype),
        grid_spec=pltpu.PrefetchScalarGridSpec(
            num_scalar_prefetch=0,
            grid=(n_pad // tile_n, n_pad // tile_k),
            in_specs=[
                pl.BlockSpec((tile_n, tile_k), lambda i, k: (i, k)),     # adj
                pl.BlockSpec((tile_k, f_out_p), lambda i, k: (k, 0)),    # xw
                pl.BlockSpec((tile_n, 1), lambda i, k: (i, 0)),          # inv_deg
                pl.BlockSpec((tile_n, f_out_p), lambda i, k: (i, 0)),    # xr
            ],
            out_specs=pl.BlockSpec((tile_n, f_out_p), lambda i, k: (i, 0)),
            scratch_shapes=[pltpu.VMEM((tile_n, f_out_p), jnp.float32)],
        ),
        compiler_params=pltpu.CompilerParams(
            dimension_semantics=("parallel", "arbitrary"),
        ),
    )(adj_p, xw, inv_deg_p, xr)

    return out_p[:n, :f_out]


def _glorot(key, shape):
    fan_in, fan_out = shape
    limit = (6.0 / (fan_in + fan_out)) ** 0.5
    return jax.random.uniform(key, shape, jnp.float32, -limit, limit)


if __name__ == "__main__":
    key = jax.random.PRNGKey(0)
    k_x, k_adj, k_w, k_wr = jax.random.split(key, 4)

    N = 256          # number of nodes
    F_IN = 32        # in_channels
    F_OUT = 32       # out_channels

    x = jax.random.normal(k_x, (N, F_IN), jnp.float32)
    adj = (jax.random.uniform(k_adj, (N, N)) < 0.05).astype(jnp.float32)

    weight = _glorot(k_w, (F_IN, F_OUT))
    root_weight = _glorot(k_wr, (F_IN, F_OUT))
    bias = jnp.zeros((F_OUT,), jnp.float32)   # zeros() init, as in the module

    # Small tiles so the demo exercises both grid axes (2 row tiles x 2 K tiles);
    # production defaults are tile_n=256, tile_k=512.
    out = sage_conv(x, adj, weight, root_weight, bias, tile_n=128, tile_k=128)
    jax.block_until_ready(out)

    # Pure-JAX f32 reference check (kernel uses bf16 adj/xw -> looser tolerance).
    deg = jnp.maximum(adj.sum(axis=-1, keepdims=True), 1.0)
    ref = (adj @ x) / deg @ weight + x @ root_weight + bias
    assert out.shape == (N, F_OUT)
    assert jnp.allclose(out, ref, atol=2e-2, rtol=2e-2), float(
        jnp.max(jnp.abs(out - ref)))

    print("KERNEL_OK")
</pallas_src>

<mosaic_0001>
module attributes {stable_mosaic.version = 11 : i64} {
  func.func @_project_kernel(%arg0: i32, %arg1: memref<128x32xf32, #tpu.memory_space<vmem>>, %arg2: memref<32x256xf32, #tpu.memory_space<vmem>>, %arg3: memref<1x128xf32, #tpu.memory_space<vmem>>, %arg4: memref<128x128xbf16, #tpu.memory_space<vmem>>, %arg5: memref<128x128xf32, #tpu.memory_space<vmem>>) attributes {dimension_semantics = [#tpu.dimension_semantics<parallel>], iteration_bounds = array<i64: 2>, scalar_prefetch = 0 : i64, scratch_operands = 0 : i64, tpu.core_type = #tpu.core_type<tc>, window_params = [{transform_indices = @transform_0, window_bounds = array<i64: 128, 32>}, {pipeline_mode = #tpu.pipeline_mode<synchronous>, transform_indices = @transform_1, window_bounds = array<i64: 32, 256>}, {pipeline_mode = #tpu.pipeline_mode<synchronous>, transform_indices = @transform_2, window_bounds = array<i64: 1, 128>}, {transform_indices = @transform_3, window_bounds = array<i64: 128, 128>}, {transform_indices = @transform_4, window_bounds = array<i64: 128, 128>}]} {
    %c0 = arith.constant 0 : index
    %c0_0 = arith.constant 0 : index
    %0 = vector.load %arg1[%c0, %c0_0] : memref<128x32xf32, #tpu.memory_space<vmem>>, vector<128x32xf32>
    %c0_1 = arith.constant 0 : index
    %c0_2 = arith.constant 0 : index
    %1 = vector.load %arg2[%c0_1, %c0_2] : memref<32x256xf32, #tpu.memory_space<vmem>>, vector<32x256xf32>
    %cst = arith.constant dense<0.000000e+00> : vector<128x256xf32>
    %2 = tpu.matmul %0, %1, %cst {dimension_numbers = #tpu.dot_dimension_numbers<[1], [0], [0], [1], [0, 0, 1, 1], [], []>} : vector<128x32xf32>, vector<32x256xf32>, vector<128x256xf32> -> vector<128x256xf32>
    %3 = vector.extract_strided_slice %2 {offsets = [0, 0], sizes = [128, 128], strides = [1, 1]} : vector<128x256xf32> to vector<128x128xf32>
    %4 = arith.truncf %3 : vector<128x128xf32> to vector<128x128xbf16>
    %c0_3 = arith.constant 0 : index
    %c0_4 = arith.constant 0 : index
    %5 = vector.load %arg4[%c0_3, %c0_4] : memref<128x128xbf16, #tpu.memory_space<vmem>>, vector<128x128xbf16>
    tpu.vector_store %arg4[%c0_3, %c0_4], %4 {strides = array<i32>} : memref<128x128xbf16, #tpu.memory_space<vmem>>, vector<128x128xbf16>,
    %6 = vector.extract_strided_slice %2 {offsets = [0, 128], sizes = [128, 128], strides = [1, 1]} : vector<128x256xf32> to vector<128x128xf32>
    %c0_5 = arith.constant 0 : index
    %c0_6 = arith.constant 0 : index
    %7 = vector.load %arg3[%c0_5, %c0_6] : memref<1x128xf32, #tpu.memory_space<vmem>>, vector<1x128xf32>
    %8 = vector.broadcast %7 : vector<1x128xf32> to vector<128x128xf32>
    %9 = arith.addf %6, %8 : vector<128x128xf32>
    %c0_7 = arith.constant 0 : index
    %c0_8 = arith.constant 0 : index
    %10 = vector.load %arg5[%c0_7, %c0_8] : memref<128x128xf32, #tpu.memory_space<vmem>>, vector<128x128xf32>
    tpu.vector_store %arg5[%c0_7, %c0_8], %9 {strides = array<i32>} : memref<128x128xf32, #tpu.memory_space<vmem>>, vector<128x128xf32>,
    return
  }
  func.func @transform_0(%arg0: i32) -> (i32, i32) {
    %c0_i32 = arith.constant 0 : i32
    %c0_i32_0 = arith.constant 0 : i32
    return %arg0, %c0_i32 : i32, i32
  }
  func.func @transform_1(%arg0: i32) -> (i32, i32) {
    %c0_i32 = arith.constant 0 : i32
    %c0_i32_0 = arith.constant 0 : i32
    %c0_i32_1 = arith.constant 0 : i32
    return %c0_i32, %c0_i32_0 : i32, i32
  }
  func.func @transform_2(%arg0: i32) -> (i32, i32) {
    %c0_i32 = arith.constant 0 : i32
    %c0_i32_0 = arith.constant 0 : i32
    %c0_i32_1 = arith.constant 0 : i32
    return %c0_i32, %c0_i32_0 : i32, i32
  }
  func.func @transform_3(%arg0: i32) -> (i32, i32) {
    %c0_i32 = arith.constant 0 : i32
    %c0_i32_0 = arith.constant 0 : i32
    return %arg0, %c0_i32 : i32, i32
  }
  func.func @transform_4(%arg0: i32) -> (i32, i32) {
    %c0_i32 = arith.constant 0 : i32
    %c0_i32_0 = arith.constant 0 : i32
    return %arg0, %c0_i32 : i32, i32
  }
}

</mosaic_0001>

<llo_original>
// kernel: tpu_custom_call.1
$region0: #{tpu_custom_call.1}
  #allocation0 [shape = 'u32[]', space=smem, size = 0x4, offset = 0x4, fixed_abs, tag = 'smem constant byte address 0x4 - core index']
  #allocation1 [shape = 'u32[72,128]{1,0:T(1,128)}', space=vmem, size = 0x9000, scoped, tag = 'internal scratch']
  %s0 = inlined_call_operand.vmem [shape: f32[256,32], index: 0, kind: input, shape index: {}]
  %s1 = inlined_call_operand.vmem [shape: f32[32,256], index: 1, kind: input, shape index: {}]
  %s2 = inlined_call_operand.vmem [shape: f32[1,128], index: 2, kind: input, shape index: {}]
  %s3 = inlined_call_operand.hbm [shape: bf16[256,128], index: 3, kind: output, shape index: {0}]
  %s4 = inlined_call_operand.hbm [shape: f32[256,128], index: 4, kind: output, shape index: {1}]
  %5 = xla_tuple %s3, %s4
  %s6 = sld [smem:[#allocation0]]
  $region53: #{tpu_custom_call.1} parent=0
    _
  %s8 = ssub.s32 1, %s6
  %s9 = scalar_select 0, %s8, %s6
  $region1: #{tpu_custom_call.1} parent=0
    #allocation2 [shape = 'u8[65536]{0}', space=vmem, size = 0x10000, scoped, tag = 'output window, operand 0']
    #allocation3 [shape = 's32[2]{0}', space=sflag, size = 0x8, scoped, tag = 'scoped memory for tpu_custom_call.1']
    #allocation4 [shape = 'u8[131072]{0}', space=vmem, size = 0x20000, scoped, tag = 'output window, operand 1']
    #allocation5 [shape = 's32[2]{0}', space=sflag, size = 0x8, scoped, tag = 'scoped memory for tpu_custom_call.1']
    %10 = vsyncpa [#allocation3], 0
    %s11 = scalar_lea.sflag [#allocation3], 1
    %12 = vsyncpa %s11, 0
    %13 = vsyncpa [#allocation5], 0
    %s14 = scalar_lea.sflag [#allocation5], 1
    %15 = vsyncpa %s14, 0
    loop: start=0, step=1, limit=4
    $region2: #{tpu_custom_call.1} parent=1 // loop_pre_header
      _
    $region3: #{tpu_custom_call.1} parent=1 // loop_header
      %s17 = sphi 0, %s21
      %p18 = scmp.ge.s32.totalorder %s17, 4
      %s27 = sphi 0, %s29
      %s30 = sphi 0, %s27
      %s31 = sphi 0, %s30
      %s47 = sphi 0, %s31
      %s51 = sphi 0, %s51
      %s53 = sphi 0, %s51
      %s54 = sphi 0, %s53
      %s68 = sphi 0, %s54
      %s72 = sphi 0, %s72
      %s74 = sphi 0, %s72
      %s75 = sphi 0, %s74
      %s89 = sphi 0, %s75
      %s95 = sphi 0, %s97
      %s98 = sphi 0, %s95
      %s99 = sphi 0, %s98
      %s115 = sphi 0, %s99
      %s121 = sphi 0, %s123
      %s124 = sphi 0, %s121
      %s125 = sphi 0, %s124
      %s141 = sphi 0, %s125
    $region4: #{tpu_custom_call.1} parent=1 // loop_header_branch
      %20 = sbr.rel (%p18) target = $region8
    $region5: #{tpu_custom_call.1} parent=1 // loop_body
      %s22 = ssub.s32 %s17, 1
      %s23 = ssub.s32 %s17, 2
      %s24 = sadd.s32 %s17, 1
      %s25 = ssub.s32 %s17, %s24
      %p26 = scmp.eq.s32.totalorder %s25, 0
      %s28 = sadd.s32 %s27, 1
      %s29 = scalar_select %p26, %s27, %s28
      %p32 = pneg %p26
      %p33 = scmp.eq.s32.totalorder %s17, 1
      %p34 = por %p32, %p33
      %p35 = scmp.ne.s32.totalorder %s27, %s30
      %p36 = scmp.eq.s32.totalorder %s17, 0
      %p37 = por %p35, %p36
      %p38 = scmp.ne.s32.totalorder %s27, %s30
      %p39 = scmp.eq.s32.totalorder %s22, 1
      %p40 = por %p38, %p39
      %p41 = scmp.ne.s32.totalorder %s30, %s31
      %p42 = scmp.eq.s32.totalorder %s22, 0
      %p43 = por %p41, %p42
      %p44 = scmp.ne.s32.totalorder %s30, %s31
      %p45 = scmp.eq.s32.totalorder %s23, 1
      %p46 = por %p44, %p45
      %p48 = scmp.ne.s32.totalorder %s31, %s47
      %p49 = scmp.eq.s32.totalorder %s23, 0
      %p50 = por %p48, %p49
      %s52 = sadd.s32 %s51, 1
      %p55 = scmp.eq.s32.totalorder %s17, 1
      %p56 = scmp.ne.s32.totalorder %s51, %s53
      %p57 = scmp.eq.s32.totalorder %s17, 0
      %p58 = por %p56, %p57
      %p59 = scmp.ne.s32.totalorder %s51, %s53
      %p60 = scmp.eq.s32.totalorder %s22, 1
      %p61 = por %p59, %p60
      %p62 = scmp.ne.s32.totalorder %s53, %s54
      %p63 = scmp.eq.s32.totalorder %s22, 0
      %p64 = por %p62, %p63
      %p65 = scmp.ne.s32.totalorder %s53, %s54
      %p66 = scmp.eq.s32.totalorder %s23, 1
      %p67 = por %p65, %p66
      %p69 = scmp.ne.s32.totalorder %s54, %s68
      %p70 = scmp.eq.s32.totalorder %s23, 0
      %p71 = por %p69, %p70
      %s73 = sadd.s32 %s72, 1
      %p76 = scmp.eq.s32.totalorder %s17, 1
      %p77 = scmp.ne.s32.totalorder %s72, %s74
      %p78 = scmp.eq.s32.totalorder %s17, 0
      %p79 = por %p77, %p78
      %p80 = scmp.ne.s32.totalorder %s72, %s74
      %p81 = scmp.eq.s32.totalorder %s22, 1
      %p82 = por %p80, %p81
      %p83 = scmp.ne.s32.totalorder %s74, %s75
      %p84 = scmp.eq.s32.totalorder %s22, 0
      %p85 = por %p83, %p84
      %p86 = scmp.ne.s32.totalorder %s74, %s75
      %p87 = scmp.eq.s32.totalorder %s23, 1
      %p88 = por %p86, %p87
      %p90 = scmp.ne.s32.totalorder %s75, %s89
      %p91 = scmp.eq.s32.totalorder %s23, 0
      %p92 = por %p90, %p91
      %s93 = ssub.s32 %s17, %s24
      %p94 = scmp.eq.s32.totalorder %s93, 0
      %s96 = sadd.s32 %s95, 1
      %s97 = scalar_select %p94, %s95, %s96
      %p100 = pneg %p94
      %p101 = scmp.eq.s32.totalorder %s17, 1
      %p102 = por %p100, %p101
      %p103 = scmp.ne.s32.totalorder %s95, %s98
      %p104 = scmp.eq.s32.totalorder %s17, 0
      %p105 = por %p103, %p104
      %p106 = scmp.ne.s32.totalorder %s95, %s98
      %p107 = scmp.eq.s32.totalorder %s22, 1
      %p108 = por %p106, %p107
      %p109 = scmp.ne.s32.totalorder %s98, %s99
      %p110 = scmp.eq.s32.totalorder %s22, 0
      %p111 = por %p109, %p110
      %p112 = scmp.ne.s32.totalorder %s98, %s99
      %p113 = scmp.eq.s32.totalorder %s23, 1
      %p114 = por %p112, %p113
      %p116 = scmp.ne.s32.totalorder %s99, %s115
      %p117 = scmp.eq.s32.totalorder %s23, 0
      %p118 = por %p116, %p117
      %s119 = ssub.s32 %s17, %s24
      %p120 = scmp.eq.s32.totalorder %s119, 0
      %s122 = sadd.s32 %s121, 1
      %s123 = scalar_select %p120, %s121, %s122
      %p126 = pneg %p120
      %p127 = scmp.eq.s32.totalorder %s17, 1
      %p128 = por %p126, %p127
      %p129 = scmp.ne.s32.totalorder %s121, %s124
      %p130 = scmp.eq.s32.totalorder %s17, 0
      %p131 = por %p129, %p130
      %p132 = scmp.ne.s32.totalorder %s121, %s124
      %p133 = scmp.eq.s32.totalorder %s22, 1
      %p134 = por %p132, %p133
      %p135 = scmp.ne.s32.totalorder %s124, %s125
      %p136 = scmp.eq.s32.totalorder %s22, 0
      %p137 = por %p135, %p136
      %p138 = scmp.ne.s32.totalorder %s124, %s125
      %p139 = scmp.eq.s32.totalorder %s23, 1
      %p140 = por %p138, %p139
      %p142 = scmp.ne.s32.totalorder %s125, %s141
      %p143 = scmp.eq.s32.totalorder %s23, 0
      %p144 = por %p142, %p143
      %p145 = scmp.le.s32.totalorder 1, %s17
      %p146 = scmp.lt.s32.totalorder %s17, 3
      %p147 = pnand %p145, %p146
      %p148 = pneg %p147
      // Predicated region
      $region9: #{tpu_custom_call.1} parent=5 // pred_check
        _
      $region10: #{tpu_custom_call.1} parent=5 // pred_check_branch
        %150 = sbr.rel (%p147) target = $region12
      $region11: #{tpu_custom_call.1} parent=5 // pred_region
        %s151 = ssub.s32 %s17, 1
        // Predicated region
        $region13: #{tpu_custom_call.1} parent=11 // pred_check
          %p152 = pneg %p64
        $region14: #{tpu_custom_call.1} parent=11 // pred_check_branch
          %154 = sbr.rel (%p152) target = $region16
        $region15: #{tpu_custom_call.1} parent=11 // pred_region
          _
        $region16: #{tpu_custom_call.1} parent=11 // pred_fallthru
          _
        // Predicated region
        $region17: #{tpu_custom_call.1} parent=11 // pred_check
          %p155 = pneg %p85
        $region18: #{tpu_custom_call.1} parent=11 // pred_check_branch
          %157 = sbr.rel (%p155) target = $region20
        $region19: #{tpu_custom_call.1} parent=11 // pred_region
          _
        $region20: #{tpu_custom_call.1} parent=11 // pred_fallthru
          _
      $region12: #{tpu_custom_call.1} parent=5 // pred_fallthru
        _
      %p158 = scmp.lt.s32.totalorder %s17, 2
      // Predicated region
      $region21: #{tpu_custom_call.1} parent=5 // pred_check
        %p159 = pneg %p158
      $region22: #{tpu_custom_call.1} parent=5 // pred_check_branch
        %161 = sbr.rel (%p159) target = $region24
      $region23: #{tpu_custom_call.1} parent=5 // pred_region
        // Predicated region
        $region25: #{tpu_custom_call.1} parent=23 // pred_check
          %p162 = pneg %p37
        $region26: #{tpu_custom_call.1} parent=23 // pred_check_branch
          %164 = sbr.rel (%p162) target = $region28
        $region27: #{tpu_custom_call.1} parent=23 // pred_region
          %s165 = smul.u32 16, %s17
          %p166 = scmp.lt.s32.totalorder %s165, 31
          %s167 = scalar_select %p166, %s165, 31
          %s168 = smul.addr %s167, 8
          %s169 = scalar_lea.vmem %s0, %s168
          %s170 = smul.u32 16, %s17
        $region28: #{tpu_custom_call.1} parent=23 // pred_fallthru
          _
      $region24: #{tpu_custom_call.1} parent=5 // pred_fallthru
        _
      %p171 = scmp.le.s32.totalorder 1, %s17
      %p172 = scmp.lt.s32.totalorder %s17, 3
      %p173 = pnand %p171, %p172
      %p174 = pneg %p173
      // Predicated region
      $region29: #{tpu_custom_call.1} parent=5 // pred_check
        _
      $region30: #{tpu_custom_call.1} parent=5 // pred_check_branch
        %176 = sbr.rel (%p173) target = $region32
      $region31: #{tpu_custom_call.1} parent=5 // pred_region
        %s177 = ssub.s32 %s17, 1
        %s178 = smul.u32 16, %s22
        %p179 = scmp.lt.s32.totalorder %s178, 31
        %s180 = scalar_select %p179, %s178, 31
        %s181 = smul.addr %s180, 8
        %s182 = scalar_lea.vmem %s0, %s181
        %p183 = pneg %p43
        %p184 = pneg %p40
        %p185 = pneg %p64
        %p186 = pneg %p61
        %p187 = pneg %p85
        %p188 = pneg %p82
        %p189 = pneg %p111
        %p190 = pneg %p108
        %s191 = sand.u32 %s98, 1
        %s192 = scalar_lea.sflag [#allocation3], %s191
        %s193 = sand.u32 %s98, 1
        %s194 = smul.addr %s193, 64
        %s195 = scalar_lea.vmem [#allocation2], %s194
        %p196 = pneg %p137
        %p197 = pneg %p134
        %s198 = sand.u32 %s124, 1
        %s199 = scalar_lea.sflag [#allocation5], %s198
        %s200 = sand.u32 %s124, 1
        %s201 = smul.addr %s200, 128
        %s202 = scalar_lea.vmem [#allocation4], %s201
        %s203 = smul.u32 16, %s22
        %p204 = scmp.lt.s32.totalorder %s203, 31
        %s205 = scalar_select %p204, %s203, 31
        %s206 = smul.addr %s205, 8
        %s207 = scalar_lea.vmem %s0, %s206
        %s208 = smul.u32 16, %s22
        %s209 = smul.u32 16, %s22
        %s210 = smul.u32 16, %s22
        %v211 = vld [vmem:[%s207] sm:$0xff]
        %v212 = vld [vmem:[%s207 + $0x8] sm:$0xff]
        %v213 = vld [vmem:[%s207 + $0x10] sm:$0xff]
        %v214 = vld [vmem:[%s207 + $0x18] sm:$0xff]
        %v215 = vld [vmem:[%s207 + $0x20] sm:$0xff]
        %v216 = vld [vmem:[%s207 + $0x28] sm:$0xff]
        %v217 = vld [vmem:[%s207 + $0x30] sm:$0xff]
        %v218 = vld [vmem:[%s207 + $0x38] sm:$0xff]
        %v219 = vld [vmem:[%s207 + $0x40] sm:$0xff]
        %v220 = vld [vmem:[%s207 + $0x48] sm:$0xff]
        %v221 = vld [vmem:[%s207 + $0x50] sm:$0xff]
        %v222 = vld [vmem:[%s207 + $0x58] sm:$0xff]
        %v223 = vld [vmem:[%s207 + $0x60] sm:$0xff]
        %v224 = vld [vmem:[%s207 + $0x68] sm:$0xff]
        %v225 = vld [vmem:[%s207 + $0x70] sm:$0xff]
        %v226 = vld [vmem:[%s207 + $0x78] sm:$0xff]
        %v227 = vld [vmem:[%s1] sm:$0xff]
        %v228 = vld [vmem:[%s1 + $0x8] sm:$0xff]
        %v229 = vld [vmem:[%s1 + $0x10] sm:$0xff]
        %v230 = vld [vmem:[%s1 + $0x18] sm:$0xff]
        %v231 = vld [vmem:[%s1 + $0x20] sm:$0xff]
        %v232 = vld [vmem:[%s1 + $0x28] sm:$0xff]
        %v233 = vld [vmem:[%s1 + $0x30] sm:$0xff]
        %v234 = vld [vmem:[%s1 + $0x38] sm:$0xff]
        %vm235 = vcmask 261120
        %v237 = vsel %vm235, %v211, 0
        %v240 = vsel %vm235, %v212, 0
        %v243 = vsel %vm235, %v213, 0
        %v246 = vsel %vm235, %v214, 0
        %v249 = vsel %vm235, %v215, 0
        %v252 = vsel %vm235, %v216, 0
        %v255 = vsel %vm235, %v217, 0
        %v258 = vsel %vm235, %v218, 0
        %v261 = vsel %vm235, %v219, 0
        %v264 = vsel %vm235, %v220, 0
        %v267 = vsel %vm235, %v221, 0
        %v270 = vsel %vm235, %v222, 0
        %v273 = vsel %vm235, %v223, 0
        %v276 = vsel %vm235, %v224, 0
        %v279 = vsel %vm235, %v225, 0
        %v282 = vsel %vm235, %v226, 0
        %284 = vmatpush.msra.mxu0 0.0
        %285 = vmatpush.msra.mxu0 0.0
        %286 = vmatpush.msra.mxu0 0.0
        %287 = vmatpush.msra.mxu0 0.0
        %288 = vmatpush.msra.mxu0 0.0
        %289 = vmatpush.msra.mxu0 0.0
        %290 = vmatpush.msra.mxu0 0.0
        %291 = vmatpush.msra.mxu0 0.0
        %292 = vmatpush.msra.mxu0 0.0
        %293 = vmatpush.msra.mxu0 0.0
        %294 = vmatpush.msra.mxu0 0.0
        %295 = vmatpush.msra.mxu0 0.0
        %296 = vmatpush.msra.mxu0 %v233
        %297 = vmatpush.msra.mxu0 %v231
        %298 = vmatpush.msra.mxu0 %v229
        %299 = vmatpush.msra.mxu0 %v227
        %300 = vmatmul.f32.gmra.mxu0 %v237
        %v301 = vpop.f32.mrf.mxu0
        %v302 = vadd.f32 0.0, %v301
        %303 = vmatmul.f32.gmra.mxu0 %v240
        %v304 = vpop.f32.mrf.mxu0
        %v305 = vadd.f32 0.0, %v304
        %306 = vmatmul.f32.gmra.mxu0 %v243
        %v307 = vpop.f32.mrf.mxu0
        %v308 = vadd.f32 0.0, %v307
        %309 = vmatmul.f32.gmra.mxu0 %v246
        %v310 = vpop.f32.mrf.mxu0
        %v311 = vadd.f32 0.0, %v310
        %312 = vmatmul.f32.gmra.mxu0 %v249
        %v313 = vpop.f32.mrf.mxu0
        %v314 = vadd.f32 0.0, %v313
        %315 = vmatmul.f32.gmra.mxu0 %v252
        %v316 = vpop.f32.mrf.mxu0
        %v317 = vadd.f32 0.0, %v316
        %318 = vmatmul.f32.gmra.mxu0 %v255
        %v319 = vpop.f32.mrf.mxu0
        %v320 = vadd.f32 0.0, %v319
        %321 = vmatmul.f32.gmra.mxu0 %v258
        %v322 = vpop.f32.mrf.mxu0
        %v323 = vadd.f32 0.0, %v322
        %324 = vmatmul.f32.gmra.mxu0 %v261
        %v325 = vpop.f32.mrf.mxu0
        %v326 = vadd.f32 0.0, %v325
        %327 = vmatmul.f32.gmra.mxu0 %v264
        %v328 = vpop.f32.mrf.mxu0
        %v329 = vadd.f32 0.0, %v328
        %330 = vmatmul.f32.gmra.mxu0 %v267
        %v331 = vpop.f32.mrf.mxu0
        %v332 = vadd.f32 0.0, %v331
        %333 = vmatmul.f32.gmra.mxu0 %v270
        %v334 = vpop.f32.mrf.mxu0
        %v335 = vadd.f32 0.0, %v334
        %336 = vmatmul.f32.gmra.mxu0 %v273
        %v337 = vpop.f32.mrf.mxu0
        %v338 = vadd.f32 0.0, %v337
        %339 = vmatmul.f32.gmra.mxu0 %v276
        %v340 = vpop.f32.mrf.mxu0
        %v341 = vadd.f32 0.0, %v340
        %342 = vmatmul.f32.gmra.mxu0 %v279
        %v343 = vpop.f32.mrf.mxu0
        %v344 = vadd.f32 0.0, %v343
        %345 = vmatmul.f32.gmra.mxu0 %v282
        %v346 = vpop.f32.mrf.mxu0
        %v347 = vadd.f32 0.0, %v346
        %348 = vdwg.mxu0
        %349 = vmatpush.msra.mxu0 0.0
        %350 = vmatpush.msra.mxu0 0.0
        %351 = vmatpush.msra.mxu0 0.0
        %352 = vmatpush.msra.mxu0 0.0
        %353 = vmatpush.msra.mxu0 0.0
        %354 = vmatpush.msra.mxu0 0.0
        %355 = vmatpush.msra.mxu0 0.0
        %356 = vmatpush.msra.mxu0 0.0
        %357 = vmatpush.msra.mxu0 0.0
        %358 = vmatpush.msra.mxu0 0.0
        %359 = vmatpush.msra.mxu0 0.0
        %360 = vmatpush.msra.mxu0 0.0
        %361 = vmatpush.msra.mxu0 %v234
        %362 = vmatpush.msra.mxu0 %v232
        %363 = vmatpush.msra.mxu0 %v230
        %364 = vmatpush.msra.mxu0 %v228
        %365 = vmatmul.f32.gmra.mxu0 %v237
        %v366 = vpop.f32.mrf.mxu0
        %v367 = vadd.f32 0.0, %v366
        %368 = vmatmul.f32.gmra.mxu0 %v240
        %v369 = vpop.f32.mrf.mxu0
        %v370 = vadd.f32 0.0, %v369
        %371 = vmatmul.f32.gmra.mxu0 %v243
        %v372 = vpop.f32.mrf.mxu0
        %v373 = vadd.f32 0.0, %v372
        %374 = vmatmul.f32.gmra.mxu0 %v246
        %v375 = vpop.f32.mrf.mxu0
        %v376 = vadd.f32 0.0, %v375
        %377 = vmatmul.f32.gmra.mxu0 %v249
        %v378 = vpop.f32.mrf.mxu0
        %v379 = vadd.f32 0.0, %v378
        %380 = vmatmul.f32.gmra.mxu0 %v252
        %v381 = vpop.f32.mrf.mxu0
        %v382 = vadd.f32 0.0, %v381
        %383 = vmatmul.f32.gmra.mxu0 %v255
        %v384 = vpop.f32.mrf.mxu0
        %v385 = vadd.f32 0.0, %v384
        %386 = vmatmul.f32.gmra.mxu0 %v258
        %v387 = vpop.f32.mrf.mxu0
        %v388 = vadd.f32 0.0, %v387
        %389 = vmatmul.f32.gmra.mxu0 %v261
        %v390 = vpop.f32.mrf.mxu0
        %v391 = vadd.f32 0.0, %v390
        %392 = vmatmul.f32.gmra.mxu0 %v264
        %v393 = vpop.f32.mrf.mxu0
        %v394 = vadd.f32 0.0, %v393
        %395 = vmatmul.f32.gmra.mxu0 %v267
        %v396 = vpop.f32.mrf.mxu0
        %v397 = vadd.f32 0.0, %v396
        %398 = vmatmul.f32.gmra.mxu0 %v270
        %v399 = vpop.f32.mrf.mxu0
        %v400 = vadd.f32 0.0, %v399
        %401 = vmatmul.f32.gmra.mxu0 %v273
        %v402 = vpop.f32.mrf.mxu0
        %v403 = vadd.f32 0.0, %v402
        %404 = vmatmul.f32.gmra.mxu0 %v276
        %v405 = vpop.f32.mrf.mxu0
        %v406 = vadd.f32 0.0, %v405
        %407 = vmatmul.f32.gmra.mxu0 %v279
        %v408 = vpop.f32.mrf.mxu0
        %v409 = vadd.f32 0.0, %v408
        %410 = vmatmul.f32.gmra.mxu0 %v282
        %v411 = vpop.f32.mrf.mxu0
        %v412 = vadd.f32 0.0, %v411
        %413 = vdwg.mxu0
        %v414 = vpack.c.bf16 %v302, %v302
        %v415 = vpack.c.bf16 %v305, %v305
        %v416 = vpack.c.bf16 %v308, %v308
        %v417 = vpack.c.bf16 %v311, %v311
        %v418 = vpack.c.bf16 %v314, %v314
        %v419 = vpack.c.bf16 %v317, %v317
        %v420 = vpack.c.bf16 %v320, %v320
        %v421 = vpack.c.bf16 %v323, %v323
        %v422 = vpack.c.bf16 %v326, %v326
        %v423 = vpack.c.bf16 %v329, %v329
        %v424 = vpack.c.bf16 %v332, %v332
        %v425 = vpack.c.bf16 %v335, %v335
        %v426 = vpack.c.bf16 %v338, %v338
        %v427 = vpack.c.bf16 %v341, %v341
        %v428 = vpack.c.bf16 %v344, %v344
        %v429 = vpack.c.bf16 %v347, %v347
        %430 = vst [vmem:[%s195] sm:$0xf] %v414
        %431 = vst [vmem:[%s195 + $0x4] sm:$0xf] %v415
        %432 = vst [vmem:[%s195 + $0x8] sm:$0xf] %v416
        %433 = vst [vmem:[%s195 + $0xc] sm:$0xf] %v417
        %434 = vst [vmem:[%s195 + $0x10] sm:$0xf] %v418
        %435 = vst [vmem:[%s195 + $0x14] sm:$0xf] %v419
        %436 = vst [vmem:[%s195 + $0x18] sm:$0xf] %v420
        %437 = vst [vmem:[%s195 + $0x1c] sm:$0xf] %v421
        %438 = vst [vmem:[%s195 + $0x20] sm:$0xf] %v422
        %439 = vst [vmem:[%s195 + $0x24] sm:$0xf] %v423
        %440 = vst [vmem:[%s195 + $0x28] sm:$0xf] %v424
        %441 = vst [vmem:[%s195 + $0x2c] sm:$0xf] %v425
        %442 = vst [vmem:[%s195 + $0x30] sm:$0xf] %v426
        %443 = vst [vmem:[%s195 + $0x34] sm:$0xf] %v427
        %444 = vst [vmem:[%s195 + $0x38] sm:$0xf] %v428
        %445 = vst [vmem:[%s195 + $0x3c] sm:$0xf] %v429
        %v446 = vld [vmem:[%s2] sm:$0x1]
        %v448 = vperm.slane %v446, 0
        %v450 = vadd.f32 %v367, %v448
        %v451 = vadd.f32 %v370, %v448
        %v452 = vadd.f32 %v373, %v448
        %v453 = vadd.f32 %v376, %v448
        %v454 = vadd.f32 %v379, %v448
        %v455 = vadd.f32 %v382, %v448
        %v456 = vadd.f32 %v385, %v448
        %v457 = vadd.f32 %v388, %v448
        %v458 = vadd.f32 %v391, %v448
        %v459 = vadd.f32 %v394, %v448
        %v460 = vadd.f32 %v397, %v448
        %v461 = vadd.f32 %v400, %v448
        %v462 = vadd.f32 %v403, %v448
        %v463 = vadd.f32 %v406, %v448
        %v464 = vadd.f32 %v409, %v448
        %v465 = vadd.f32 %v412, %v448
        %466 = vst [vmem:[%s202] sm:$0xff] %v450
        %467 = vst [vmem:[%s202 + $0x8] sm:$0xff] %v451
        %468 = vst [vmem:[%s202 + $0x10] sm:$0xff] %v452
        %469 = vst [vmem:[%s202 + $0x18] sm:$0xff] %v453
        %470 = vst [vmem:[%s202 + $0x20] sm:$0xff] %v454
        %471 = vst [vmem:[%s202 + $0x28] sm:$0xff] %v455
        %472 = vst [vmem:[%s202 + $0x30] sm:$0xff] %v456
        %473 = vst [vmem:[%s202 + $0x38] sm:$0xff] %v457
        %474 = vst [vmem:[%s202 + $0x40] sm:$0xff] %v458
        %475 = vst [vmem:[%s202 + $0x48] sm:$0xff] %v459
        %476 = vst [vmem:[%s202 + $0x50] sm:$0xff] %v460
        %477 = vst [vmem:[%s202 + $0x58] sm:$0xff] %v461
        %478 = vst [vmem:[%s202 + $0x60] sm:$0xff] %v462
        %479 = vst [vmem:[%s202 + $0x68] sm:$0xff] %v463
        %480 = vst [vmem:[%s202 + $0x70] sm:$0xff] %v464
        %481 = vst [vmem:[%s202 + $0x78] sm:$0xff] %v465
        %s482 = sand.u32 %s98, 1
        %s483 = scalar_lea.sflag [#allocation3], %s482
        %s484 = sand.u32 %s98, 1
        %s485 = smul.addr %s484, 64
        %s486 = scalar_lea.vmem [#allocation2], %s485
        %s487 = sand.u32 %s124, 1
        %s488 = scalar_lea.sflag [#allocation5], %s487
        %s489 = sand.u32 %s124, 1
        %s490 = smul.addr %s489, 128
        %s491 = scalar_lea.vmem [#allocation4], %s490
        // Predicated region
        $region33: #{tpu_custom_call.1} parent=31 // pred_check
          %p492 = pneg %p108
        $region34: #{tpu_custom_call.1} parent=31 // pred_check_branch
          %494 = sbr.rel (%p492) target = $region36
        $region35: #{tpu_custom_call.1} parent=31 // pred_region
          %s495 = smul.u32 16, %s22
          %497 = vsyncadd %s483, 0
          %s498 = smul.addr %s495, 4
          %s499 = scalar_lea.hbm %s3, %s498
          %s500 = sshll.u32 %s486, 4
          %s501 = int_to_ptr.vmem [resolvable:$true] %s500
          %s502 = sshll.u32 %s499, 4
          %s503 = int_to_ptr.hbm [resolvable:$true] %s502
          %508 = dma.vmem_to_hbm [thread:$0]  %s501, 1024, %s503, %s483, 64, 64, 4
        $region36: #{tpu_custom_call.1} parent=31 // pred_fallthru
          _
        // Predicated region
        $region37: #{tpu_custom_call.1} parent=31 // pred_check
          %p509 = pneg %p134
        $region38: #{tpu_custom_call.1} parent=31 // pred_check_branch
          %511 = sbr.rel (%p509) target = $region40
        $region39: #{tpu_custom_call.1} parent=31 // pred_region
          %s512 = smul.u32 16, %s22
          %514 = vsyncadd %s488, 0
          %s515 = smul.addr %s512, 8
          %s516 = scalar_lea.hbm %s4, %s515
          %s517 = sshll.u32 %s491, 4
          %s518 = int_to_ptr.vmem [resolvable:$true] %s517
          %s519 = sshll.u32 %s516, 4
          %s520 = int_to_ptr.hbm [resolvable:$true] %s519
          %525 = dma.vmem_to_hbm [thread:$0]  %s518, 2048, %s520, %s488, 128, 128, 8
        $region40: #{tpu_custom_call.1} parent=31 // pred_fallthru
          _
      $region32: #{tpu_custom_call.1} parent=5 // pred_fallthru
        _
      %p526 = scmp.le.s32.totalorder 2, %s17
      // Predicated region
      $region41: #{tpu_custom_call.1} parent=5 // pred_check
        %p527 = pneg %p526
      $region42: #{tpu_custom_call.1} parent=5 // pred_check_branch
        %529 = sbr.rel (%p527) target = $region44
      $region43: #{tpu_custom_call.1} parent=5 // pred_region
        %s530 = ssub.s32 %s17, 2
        // Predicated region
        $region45: #{tpu_custom_call.1} parent=43 // pred_check
          %p531 = pneg %p114
        $region46: #{tpu_custom_call.1} parent=43 // pred_check_branch
          %533 = sbr.rel (%p531) target = $region48
        $region47: #{tpu_custom_call.1} parent=43 // pred_region
          %s534 = sand.u32 %s99, 1
          %s535 = scalar_lea.sflag [#allocation3], %s534
          %s536 = sand.u32 %s99, 1
          %s537 = smul.addr %s536, 64
          %s538 = scalar_lea.vmem [#allocation2], %s537
          %540 = dma.done %s535, 1024
        $region48: #{tpu_custom_call.1} parent=43 // pred_fallthru
          _
        // Predicated region
        $region49: #{tpu_custom_call.1} parent=43 // pred_check
          %p541 = pneg %p140
        $region50: #{tpu_custom_call.1} parent=43 // pred_check_branch
          %543 = sbr.rel (%p541) target = $region52
        $region51: #{tpu_custom_call.1} parent=43 // pred_region
          %s544 = sand.u32 %s125, 1
          %s545 = scalar_lea.sflag [#allocation5], %s544
          %s546 = sand.u32 %s125, 1
          %s547 = smul.addr %s546, 128
          %s548 = scalar_lea.vmem [#allocation4], %s547
          %550 = dma.done %s545, 2048
        $region52: #{tpu_custom_call.1} parent=43 // pred_fallthru
          _
      $region44: #{tpu_custom_call.1} parent=5 // pred_fallthru
        _
    $region6: #{tpu_custom_call.1} parent=1 // loop_footer
      %s21 = sadd.s32 1, %s17
    $region7: #{tpu_custom_call.1} parent=1 // loop_footer_branch
      %16 = sbr.rel target = $region3
    $region8: #{tpu_custom_call.1} parent=1 // loop_exit
      _
    %551 = vsyncpa [#allocation3], 1
    %s552 = scalar_lea.sflag [#allocation3], 1
    %553 = vsyncpa %s552, 1
    %554 = vsyncpa [#allocation5], 1
    %s555 = scalar_lea.sflag [#allocation5], 1
    %556 = vsyncpa %s555, 1

</llo_original>
